<compile_context>
chip_gen: v7x
topology: tpu7x:2x2x1
jax: 0.10.0
libtpu: 0.0.40
codegen_flags: <defaults>
</compile_context>

<pallas_src>
import jax
import jax.numpy as jnp
from jax.experimental import pallas as pl
from jax.experimental.pallas import tpu as pltpu

EPS = 1e-5


def fused_kernel(x_ref, res_ref, w1_ref, gb_ref, w2_ref, o_ref):
    # x_ref:   (72, P)   conv2d20 input, channel-major (f32)
    # res_ref: (24, P)   residual (x51), channel-major (f32)
    # w1_ref:  (24, 72)  conv2d20 weight (O, I) (f32)
    # gb_ref:  (24, 2)   [:, 0] = batchnorm gamma, [:, 1] = batchnorm beta
    # w2_ref:  (144, 24) conv2d21 weight (O, I) (f32)
    # o_ref:   (144, P)  output, channel-major (f32)
    x = x_ref[...]

    # 1x1 conv #1 on the MXU: bf16 operands, f32 accumulation.
    y = jnp.dot(
        w1_ref[...].astype(jnp.bfloat16),
        x.astype(jnp.bfloat16),
        preferred_element_type=jnp.float32,
    )  # (24, P) f32

    # BatchNorm2d (training mode): per-channel batch statistics over P=N*H*W,
    # biased variance.  Single pass over y: both lane reductions (XLU) share
    # one read of y; var via E[y^2] - mean^2, clamped for safety.
    p = y.shape[1]
    inv_p = 1.0 / p
    s1 = jnp.sum(y, axis=-1, keepdims=True)            # (24, 1)
    s2 = jnp.sum(y * y, axis=-1, keepdims=True)        # (24, 1)
    mean = s1 * inv_p
    var = jnp.maximum(s2 * inv_p - mean * mean, 0.0)
    inv_std = jax.lax.rsqrt(var + EPS)                 # EUP

    gamma = gb_ref[:, 0:1]                             # (24, 1)
    beta = gb_ref[:, 1:2]                              # (24, 1)

    # Fold normalize + affine into one scale/shift, fuse with residual add:
    #   z = y * scale + (beta - mean*scale) + res
    scale = inv_std * gamma                            # (24, 1)
    shift = beta - mean * scale                        # (24, 1)
    z = y * scale + shift + res_ref[...]               # (24, P) f32

    # 1x1 conv #2: (144,24) @ (24,P) -> (144,P); bf16 operands, f32 accum.
    o_ref[...] = jnp.dot(
        w2_ref[...].astype(jnp.bfloat16),
        z.astype(jnp.bfloat16),
        preferred_element_type=jnp.float32,
    )
    # TODO(synk): PyTorch BatchNorm2d in training mode also updates
    # running_mean/running_var (momentum=3e-4); not emitted here since only
    # the activation output is required by the module's forward.


def _to_channel_major(x):
    """NCHW -> (C, N*H*W).  For N=1 this is a pure reshape (no transpose)."""
    n, c, h, w = x.shape
    if n == 1:
        return x.reshape(c, h * w)
    return jnp.transpose(x, (1, 0, 2, 3)).reshape(c, n * h * w)


def fused_forward(x57_nchw, x51_nchw, w1_oihw, gamma, beta, w2_oihw):
    """x57_nchw: (N,72,H,W), x51_nchw: (N,24,H,W) -> (N,144,H,W)."""
    n, c_in, h, w = x57_nchw.shape
    p = n * h * w
    c_mid = w1_oihw.shape[0]    # 24
    c_out = w2_oihw.shape[0]    # 144

    # Inputs in (C, P) layout -- pure reshapes for N=1.
    x_cp = _to_channel_major(x57_nchw)                   # (72, P)
    res_cp = _to_channel_major(x51_nchw)                 # (24, P)

    # Conv weights keep their native (O, I) orientation.
    w1 = w1_oihw.reshape(c_mid, c_in)                    # (24, 72)
    w2 = w2_oihw.reshape(c_out, c_mid)                   # (144, 24)

    # Pack gamma/beta into a single (C_mid, 2) input (one DMA / VMEM tile).
    gb = jnp.stack([gamma, beta], axis=1).astype(jnp.float32)  # (24, 2)

    flops = 2 * p * (c_mid * c_in + c_out * c_mid)
    bytes_accessed = 4 * (
        p * (c_in + c_mid + c_out)        # activations in/out (f32)
        + c_mid * c_in + c_out * c_mid    # weights
        + 2 * c_mid                       # gamma/beta
    )

    out_cp = pl.pallas_call(
        fused_kernel,
        out_shape=jax.ShapeDtypeStruct((c_out, p), jnp.float32),
        in_specs=[pl.BlockSpec(memory_space=pltpu.MemorySpace.VMEM)] * 5,
        out_specs=pl.BlockSpec(memory_space=pltpu.MemorySpace.VMEM),
        cost_estimate=pl.CostEstimate(
            flops=flops,
            transcendentals=c_mid,          # rsqrt per channel
            bytes_accessed=bytes_accessed,
        ),
    )(x_cp, res_cp, w1, gb, w2)

    # (144, P) -> NCHW (pure reshape for N=1).
    if n == 1:
        return out_cp.reshape(1, c_out, h, w)
    return jnp.transpose(out_cp.reshape(c_out, n, h, w), (1, 0, 2, 3))


def reference_forward(x57, x51, w1_oihw, gamma, beta, w2_oihw):
    # Pure-JAX f32 reference for validation (same math, NCHW).
    y = jnp.einsum("nchw,oc->nohw", x57, w1_oihw.reshape(24, 72))
    mean = jnp.mean(y, axis=(0, 2, 3), keepdims=True)
    var = jnp.mean((y - mean) ** 2, axis=(0, 2, 3), keepdims=True)
    yn = (y - mean) * jax.lax.rsqrt(var + EPS)
    yn = yn * gamma.reshape(1, -1, 1, 1) + beta.reshape(1, -1, 1, 1)
    z = yn + x51
    return jnp.einsum("nchw,oc->nohw", z, w2_oihw.reshape(144, 24))


if __name__ == "__main__":
    key = jax.random.PRNGKey(0)
    k1, k2, k3, k4, k5, k6 = jax.random.split(key, 6)

    N, H, W = 1, 28, 28
    # inputs (match module: x57 has 72 channels, x51 has 24 channels)
    x57 = jax.random.normal(k1, (N, 72, H, W), dtype=jnp.float32)
    x51 = jax.random.normal(k2, (N, 24, H, W), dtype=jnp.float32)

    # deterministic parameters
    w1 = jax.random.normal(k3, (24, 72, 1, 1), dtype=jnp.float32) * 0.1  # conv2d20
    w2 = jax.random.normal(k4, (144, 24, 1, 1), dtype=jnp.float32) * 0.1  # conv2d21
    gamma = 1.0 + 0.1 * jax.random.normal(k5, (24,), dtype=jnp.float32)   # bn weight
    beta = 0.1 * jax.random.normal(k6, (24,), dtype=jnp.float32)          # bn bias

    out = fused_forward(x57, x51, w1, gamma, beta, w2)
    out = jax.block_until_ready(out)

    ref = jax.block_until_ready(reference_forward(x57, x51, w1, gamma, beta, w2))
    assert out.shape == (N, 144, H, W), out.shape
    # bf16 MXU operands vs. f32 reference: tolerance relaxed accordingly.
    assert jnp.allclose(out, ref, atol=2e-2, rtol=2e-2), float(
        jnp.max(jnp.abs(out - ref))
    )

    print("KERNEL_OK")
</pallas_src>

<mosaic_0001>
module attributes {stable_mosaic.version = 11 : i64} {
  func.func @fused_kernel(%arg0: memref<72x784xf32, #tpu.memory_space<vmem>>, %arg1: memref<24x784xf32, #tpu.memory_space<vmem>>, %arg2: memref<24x72xf32, #tpu.memory_space<vmem>>, %arg3: memref<24x2xf32, #tpu.memory_space<vmem>>, %arg4: memref<144x24xf32, #tpu.memory_space<vmem>>, %arg5: memref<144x784xf32, #tpu.memory_space<vmem>>) attributes {dimension_semantics = [], scalar_prefetch = 0 : i64, scratch_operands = 0 : i64, tpu.core_type = #tpu.core_type<tc>} {
    %c0 = arith.constant 0 : index
    %c0_0 = arith.constant 0 : index
    %0 = vector.load %arg0[%c0, %c0_0] : memref<72x784xf32, #tpu.memory_space<vmem>>, vector<72x784xf32>
    %c0_1 = arith.constant 0 : index
    %c0_2 = arith.constant 0 : index
    %1 = vector.load %arg2[%c0_1, %c0_2] : memref<24x72xf32, #tpu.memory_space<vmem>>, vector<24x72xf32>
    %2 = arith.truncf %1 : vector<24x72xf32> to vector<24x72xbf16>
    %3 = arith.truncf %0 : vector<72x784xf32> to vector<72x784xbf16>
    %cst = arith.constant dense<0.000000e+00> : vector<24x784xf32>
    %4 = tpu.matmul %2, %3, %cst {dimension_numbers = #tpu.dot_dimension_numbers<[1], [0], [0], [1], [0, 0, 1, 1], [], []>} : vector<24x72xbf16>, vector<72x784xbf16>, vector<24x784xf32> -> vector<24x784xf32>
    %cst_3 = arith.constant dense<0.000000e+00> : vector<24xf32>
    %5 = vector.multi_reduction <add>, %4, %cst_3 [1] : vector<24x784xf32> to vector<24xf32>
    %6 = vector.shape_cast %5 : vector<24xf32> to vector<24x1xf32>
    %7 = arith.mulf %4, %4 : vector<24x784xf32>
    %cst_4 = arith.constant dense<0.000000e+00> : vector<24xf32>
    %8 = vector.multi_reduction <add>, %7, %cst_4 [1] : vector<24x784xf32> to vector<24xf32>
    %9 = vector.shape_cast %8 : vector<24xf32> to vector<24x1xf32>
    %cst_5 = arith.constant 0.00127551018 : f32
    %10 = vector.broadcast %cst_5 : f32 to vector<24x1xf32>
    %11 = arith.mulf %6, %10 : vector<24x1xf32>
    %cst_6 = arith.constant 0.00127551018 : f32
    %12 = vector.broadcast %cst_6 : f32 to vector<24x1xf32>
    %13 = arith.mulf %9, %12 : vector<24x1xf32>
    %14 = arith.mulf %11, %11 : vector<24x1xf32>
    %15 = arith.subf %13, %14 : vector<24x1xf32>
    %cst_7 = arith.constant 0.000000e+00 : f32
    %16 = vector.broadcast %cst_7 : f32 to vector<24x1xf32>
    %17 = arith.maximumf %15, %16 : vector<24x1xf32>
    %cst_8 = arith.constant 9.99999974E-6 : f32
    %18 = vector.broadcast %cst_8 : f32 to vector<24x1xf32>
    %19 = arith.addf %17, %18 : vector<24x1xf32>
    %20 = math.rsqrt %19 : vector<24x1xf32>
    %c0_9 = arith.constant 0 : index
    %c0_10 = arith.constant 0 : index
    %21 = vector.load %arg3[%c0_9, %c0_10] : memref<24x2xf32, #tpu.memory_space<vmem>>, vector<24x1xf32>
    %c0_11 = arith.constant 0 : index
    %c1 = arith.constant 1 : index
    %22 = vector.load %arg3[%c0_11, %c1] : memref<24x2xf32, #tpu.memory_space<vmem>>, vector<24x1xf32>
    %23 = arith.mulf %20, %21 : vector<24x1xf32>
    %24 = arith.mulf %11, %23 : vector<24x1xf32>
    %25 = arith.subf %22, %24 : vector<24x1xf32>
    %26 = vector.broadcast %23 : vector<24x1xf32> to vector<24x784xf32>
    %27 = arith.mulf %4, %26 : vector<24x784xf32>
    %28 = vector.broadcast %25 : vector<24x1xf32> to vector<24x784xf32>
    %29 = arith.addf %27, %28 : vector<24x784xf32>
    %c0_12 = arith.constant 0 : index
    %c0_13 = arith.constant 0 : index
    %30 = vector.load %arg1[%c0_12, %c0_13] : memref<24x784xf32, #tpu.memory_space<vmem>>, vector<24x784xf32>
    %31 = arith.addf %29, %30 : vector<24x784xf32>
    %c0_14 = arith.constant 0 : index
    %c0_15 = arith.constant 0 : index
    %32 = vector.load %arg4[%c0_14, %c0_15] : memref<144x24xf32, #tpu.memory_space<vmem>>, vector<144x24xf32>
    %33 = arith.truncf %32 : vector<144x24xf32> to vector<144x24xbf16>
    %34 = arith.truncf %31 : vector<24x784xf32> to vector<24x784xbf16>
    %cst_16 = arith.constant dense<0.000000e+00> : vector<144x784xf32>
    %35 = tpu.matmul %33, %34, %cst_16 {dimension_numbers = #tpu.dot_dimension_numbers<[1], [0], [0], [1], [0, 0, 1, 1], [], []>} : vector<144x24xbf16>, vector<24x784xbf16>, vector<144x784xf32> -> vector<144x784xf32>
    %c0_17 = arith.constant 0 : index
    %c0_18 = arith.constant 0 : index
    %36 = vector.load %arg5[%c0_17, %c0_18] : memref<144x784xf32, #tpu.memory_space<vmem>>, vector<144x784xf32>
    tpu.vector_store %arg5[%c0_17, %c0_18], %35 {strides = array<i32>} : memref<144x784xf32, #tpu.memory_space<vmem>>, vector<144x784xf32>,
    return
  }
}

</mosaic_0001>

<llo_original>
// kernel: tpu_custom_call.1
$region0: #{tpu_custom_call.1}
  #allocation0 [shape = 'u32[]', space=smem, size = 0x4, offset = 0x4, fixed_abs, tag = 'smem constant byte address 0x4 - core index']
  #allocation1 [shape = 'u32[144,128]{1,0:T(1,128)}', space=vmem, size = 0x12000, scoped, tag = 'internal scratch']
  %s0 = inlined_call_operand.hbm [shape: f32[72,784], index: 0, kind: input, shape index: {}]
  %s1 = inlined_call_operand.vmem [shape: f32[24,784], index: 1, kind: input, shape index: {}]
  %s2 = inlined_call_operand.vmem [shape: f32[24,72], index: 2, kind: input, shape index: {}]
  %s3 = inlined_call_operand.vmem [shape: f32[24,2], index: 3, kind: input, shape index: {}]
  %s4 = inlined_call_operand.vmem [shape: f32[144,24], index: 4, kind: input, shape index: {}]
  %s5 = inlined_call_operand.hbm [shape: f32[144,784], index: 5, kind: output, shape index: {}]
  %s6 = sld [smem:[#allocation0]]
  $region34: #{tpu_custom_call.1} parent=0
    _
  %s8 = ssub.s32 1, %s6
  %s9 = scalar_select 0, %s8, %s6
  $region1: #{tpu_custom_call.1} parent=0
    #allocation2 [shape = 'u8[258048]{0}', space=vmem, size = 0x3f000, scoped, tag = 'input window, operand 0, single buffered']
    #allocation3 [shape = 's32[1]{0}', space=sflag, size = 0x4, scoped, tag = 'scoped memory for tpu_custom_call.1']
    #allocation4 [shape = 's32[1]{0}', space=sflag, size = 0x4, scoped, tag = 'scoped memory for tpu_custom_call.1']
    #allocation5 [shape = 'u8[516096]{0}', space=vmem, size = 0x7e000, scoped, tag = 'output window, operand 0, single buffered']
    %10 = vsyncpa [#allocation3], 0
    %11 = vsyncpa [#allocation4], 0
    // Predicated region
    $region2: #{tpu_custom_call.1} parent=1 // pred_check
      _
    $region3: #{tpu_custom_call.1} parent=1 // pred_check_branch
      %13 = sbr.rel (0) target = $region5
    $region4: #{tpu_custom_call.1} parent=1 // pred_region
      %s15 = ssub.s32 8064, 8064
      %16 = vsyncadd [#allocation3], %s15
      %s17 = sshll.u32 [#allocation2], 4
      %s18 = int_to_ptr.vmem [resolvable:$true] %s17
      %23 = dma.hbm_to_vmem [thread:$0]  %s0, 8064, %s18, [#allocation3], 896, 896, 56
    $region5: #{tpu_custom_call.1} parent=1 // pred_fallthru
      _
    // Predicated region
    $region6: #{tpu_custom_call.1} parent=1 // pred_check
      _
    $region7: #{tpu_custom_call.1} parent=1 // pred_check_branch
      %25 = sbr.rel (0) target = $region9
    $region8: #{tpu_custom_call.1} parent=1 // pred_region
      _
    $region9: #{tpu_custom_call.1} parent=1 // pred_fallthru
      _
    // Predicated region
    $region10: #{tpu_custom_call.1} parent=1 // pred_check
      _
    $region11: #{tpu_custom_call.1} parent=1 // pred_check_branch
      %27 = sbr.rel (0) target = $region13
    $region12: #{tpu_custom_call.1} parent=1 // pred_region
      _
    $region13: #{tpu_custom_call.1} parent=1 // pred_fallthru
      _
    // Predicated region
    $region14: #{tpu_custom_call.1} parent=1 // pred_check
      _
    $region15: #{tpu_custom_call.1} parent=1 // pred_check_branch
      %29 = sbr.rel (0) target = $region17
    $region16: #{tpu_custom_call.1} parent=1 // pred_region
      _
    $region17: #{tpu_custom_call.1} parent=1 // pred_fallthru
      _
    // Predicated region
    $region18: #{tpu_custom_call.1} parent=1 // pred_check
      _
    $region19: #{tpu_custom_call.1} parent=1 // pred_check_branch
      %31 = sbr.rel (0) target = $region21
    $region20: #{tpu_custom_call.1} parent=1 // pred_region
      _
    $region21: #{tpu_custom_call.1} parent=1 // pred_fallthru
      _
    // Predicated region
    $region22: #{tpu_custom_call.1} parent=1 // pred_check
      _
    $region23: #{tpu_custom_call.1} parent=1 // pred_check_branch
      %33 = sbr.rel (0) target = $region25
    $region24: #{tpu_custom_call.1} parent=1 // pred_region
      %34 = dma.done [#allocation3], 8064
    $region25: #{tpu_custom_call.1} parent=1 // pred_fallthru
      _
    %v36 = vld [vmem:[#allocation2] sm:$0xff]
    %v37 = vld [vmem:[#allocation2 + $0x8] sm:$0xff]
    %v38 = vld [vmem:[#allocation2 + $0x10] sm:$0xff]
    %v39 = vld [vmem:[#allocation2 + $0x18] sm:$0xff]
    %v40 = vld [vmem:[#allocation2 + $0x20] sm:$0xff]
    %v41 = vld [vmem:[#allocation2 + $0x28] sm:$0xff]
    %v42 = vld [vmem:[#allocation2 + $0x30] sm:$0xff]
    %v43 = vld [vmem:[#allocation2 + $0x38] sm:$0xff]
    %v44 = vld [vmem:[#allocation2 + $0x40] sm:$0xff]
    %v45 = vld [vmem:[#allocation2 + $0x48] sm:$0xff]
    %v46 = vld [vmem:[#allocation2 + $0x50] sm:$0xff]
    %v47 = vld [vmem:[#allocation2 + $0x58] sm:$0xff]
    %v48 = vld [vmem:[#allocation2 + $0x60] sm:$0xff]
    %v49 = vld [vmem:[#allocation2 + $0x68] sm:$0xff]
    %v50 = vld [vmem:[#allocation2 + $0x70] sm:$0xff]
    %v51 = vld [vmem:[#allocation2 + $0x78] sm:$0xff]
    %v52 = vld [vmem:[#allocation2 + $0x80] sm:$0xff]
    %v53 = vld [vmem:[#allocation2 + $0x88] sm:$0xff]
    %v54 = vld [vmem:[#allocation2 + $0x90] sm:$0xff]
    %v55 = vld [vmem:[#allocation2 + $0x98] sm:$0xff]
    %v56 = vld [vmem:[#allocation2 + $0xa0] sm:$0xff]
    %v57 = vld [vmem:[#allocation2 + $0xa8] sm:$0xff]
    %v58 = vld [vmem:[#allocation2 + $0xb0] sm:$0xff]
    %v59 = vld [vmem:[#allocation2 + $0xb8] sm:$0xff]
    %v60 = vld [vmem:[#allocation2 + $0xc0] sm:$0xff]
    %v61 = vld [vmem:[#allocation2 + $0xc8] sm:$0xff]
    %v62 = vld [vmem:[#allocation2 + $0xd0] sm:$0xff]
    %v63 = vld [vmem:[#allocation2 + $0xd8] sm:$0xff]
    %v64 = vld [vmem:[#allocation2 + $0xe0] sm:$0xff]
    %v65 = vld [vmem:[#allocation2 + $0xe8] sm:$0xff]
    %v66 = vld [vmem:[#allocation2 + $0xf0] sm:$0xff]
    %v67 = vld [vmem:[#allocation2 + $0xf8] sm:$0xff]
    %v68 = vld [vmem:[#allocation2 + $0x100] sm:$0xff]
    %v69 = vld [vmem:[#allocation2 + $0x108] sm:$0xff]
    %v70 = vld [vmem:[#allocation2 + $0x110] sm:$0xff]
    %v71 = vld [vmem:[#allocation2 + $0x118] sm:$0xff]
    %v72 = vld [vmem:[#allocation2 + $0x120] sm:$0xff]
    %v73 = vld [vmem:[#allocation2 + $0x128] sm:$0xff]
    %v74 = vld [vmem:[#allocation2 + $0x130] sm:$0xff]
    %v75 = vld [vmem:[#allocation2 + $0x138] sm:$0xff]
    %v76 = vld [vmem:[#allocation2 + $0x140] sm:$0xff]
    %v77 = vld [vmem:[#allocation2 + $0x148] sm:$0xff]
    %v78 = vld [vmem:[#allocation2 + $0x150] sm:$0xff]
    %v79 = vld [vmem:[#allocation2 + $0x158] sm:$0xff]
    %v80 = vld [vmem:[#allocation2 + $0x160] sm:$0xff]
    %v81 = vld [vmem:[#allocation2 + $0x168] sm:$0xff]
    %v82 = vld [vmem:[#allocation2 + $0x170] sm:$0xff]
    %v83 = vld [vmem:[#allocation2 + $0x178] sm:$0xff]
    %v84 = vld [vmem:[#allocation2 + $0x180] sm:$0xff]
    %v85 = vld [vmem:[#allocation2 + $0x188] sm:$0xff]
    %v86 = vld [vmem:[#allocation2 + $0x190] sm:$0xff]
    %v87 = vld [vmem:[#allocation2 + $0x198] sm:$0xff]
    %v88 = vld [vmem:[#allocation2 + $0x1a0] sm:$0xff]
    %v89 = vld [vmem:[#allocation2 + $0x1a8] sm:$0xff]
    %v90 = vld [vmem:[#allocation2 + $0x1b0] sm:$0xff]
    %v91 = vld [vmem:[#allocation2 + $0x1b8] sm:$0xff]
    %v92 = vld [vmem:[#allocation2 + $0x1c0] sm:$0xff]
    %v93 = vld [vmem:[#allocation2 + $0x1c8] sm:$0xff]
    %v94 = vld [vmem:[#allocation2 + $0x1d0] sm:$0xff]
    %v95 = vld [vmem:[#allocation2 + $0x1d8] sm:$0xff]
    %v96 = vld [vmem:[#allocation2 + $0x1e0] sm:$0xff]
    %v97 = vld [vmem:[#allocation2 + $0x1e8] sm:$0xff]
    %v98 = vld [vmem:[#allocation2 + $0x1f0] sm:$0xff]
    %v99 = vld [vmem:[%s2] sm:$0xff]
    %v100 = vld [vmem:[%s2 + $0x8] sm:$0xff]
    %v101 = vld [vmem:[%s2 + $0x10] sm:$0xff]
    %v102 = vpack.c.bf16 %v100, %v99
    %v103 = vpack.c.bf16 %v101, %v101
    %v104 = vpack.c.bf16 %v43, %v36
    %v105 = vpack.c.bf16 %v44, %v37
    %v106 = vpack.c.bf16 %v45, %v38
    %v107 = vpack.c.bf16 %v46, %v39
    %v108 = vpack.c.bf16 %v47, %v40
    %v109 = vpack.c.bf16 %v48, %v41
    %v110 = vpack.c.bf16 %v49, %v42
    %v111 = vpack.c.bf16 %v57, %v50
    %v112 = vpack.c.bf16 %v58, %v51
    %v113 = vpack.c.bf16 %v59, %v52
    %v114 = vpack.c.bf16 %v60, %v53
    %v115 = vpack.c.bf16 %v61, %v54
    %v116 = vpack.c.bf16 %v62, %v55
    %v117 = vpack.c.bf16 %v63, %v56
    %v118 = vpack.c.bf16 %v71, %v64
    %v119 = vpack.c.bf16 %v72, %v65
    %v120 = vpack.c.bf16 %v73, %v66
    %v121 = vpack.c.bf16 %v74, %v67
    %v122 = vpack.c.bf16 %v75, %v68
    %v123 = vpack.c.bf16 %v76, %v69
    %v124 = vpack.c.bf16 %v77, %v70
    %v125 = vpack.c.bf16 %v85, %v78
    %v126 = vpack.c.bf16 %v86, %v79
    %v127 = vpack.c.bf16 %v87, %v80
    %v128 = vpack.c.bf16 %v88, %v81
    %v129 = vpack.c.bf16 %v89, %v82
    %v130 = vpack.c.bf16 %v90, %v83
    %v131 = vpack.c.bf16 %v91, %v84
    %v132 = vpack.c.bf16 %v92, %v92
    %v133 = vpack.c.bf16 %v93, %v93
    %v134 = vpack.c.bf16 %v94, %v94
    %v135 = vpack.c.bf16 %v95, %v95
    %v136 = vpack.c.bf16 %v96, %v96
    %v137 = vpack.c.bf16 %v97, %v97
    %v138 = vpack.c.bf16 %v98, %v98
    %vm139 = vcmask 588800
    %v141 = vsel %vm139, %v102, 0
    %v144 = vsel %vm139, %v103, 0
    %vm146 = vcmask 1043456
    %v148 = vsel %vm146, %v132, 0
    %v151 = vsel %vm146, %v133, 0
    %v154 = vsel %vm146, %v134, 0
    %v157 = vsel %vm146, %v135, 0
    %v160 = vsel %vm146, %v136, 0
    %v163 = vsel %vm146, %v137, 0
    %v166 = vsel %vm146, %v138, 0
    %168 = vmatprep.subr.bf16.mxu0 %v105
    %169 = vmatpush1.bf16.msra.mxu0 %v104
    %170 = vmatprep.subr.bf16.mxu0 %v112
    %171 = vmatpush1.bf16.msra.mxu0 %v111
    %172 = vmatprep.subr.bf16.mxu0 %v119
    %173 = vmatpush1.bf16.msra.mxu0 %v118
    %174 = vmatprep.subr.bf16.mxu0 %v126
    %175 = vmatpush1.bf16.msra.mxu0 %v125
    %176 = vmatprep.subr.bf16.mxu0 %v151
    %177 = vmatpush1.bf16.msra.mxu0 %v148
    %178 = vmatprep.subr.bf16.mxu0 0
    %179 = vmatpush1.bf16.msra.mxu0 0
    %180 = vmatprep.subr.bf16.mxu0 0
    %181 = vmatpush1.bf16.msra.mxu0 0
    %182 = vmatprep.subr.bf16.mxu0 0
    %183 = vmatpush1.bf16.msra.mxu0 0
    %184 = vmatprep.subr.bf16.mxu0 0
    %185 = vmatpush1.bf16.msra.mxu0 0
    %186 = vmatprep.subr.bf16.mxu0 0
    %187 = vmatpush1.bf16.msra.mxu0 0
    %188 = vmatprep.subr.bf16.mxu0 0
    %189 = vmatpush1.bf16.msra.mxu0 0
    %190 = vmatprep.subr.bf16.mxu0 0
    %191 = vmatpush1.bf16.msra.mxu0 0
    %192 = vmatprep.subr.bf16.mxu0 0
    %193 = vmatpush1.bf16.msra.mxu0 0
    %194 = vmatprep.subr.bf16.mxu0 0
    %195 = vmatpush1.bf16.msra.mxu0 0
    %196 = vmatprep.subr.bf16.mxu0 0
    %197 = vmatpush1.bf16.msra.mxu0 0
    %198 = vmatprep.subr.bf16.mxu0 0
    %199 = vmatpush1.bf16.msra.mxu0 0
    %200 = vmatprep.mubr.bf16.mxu0 0
    %201 = vmatmul.mubr.bf16.gmra.mrb[0].mxu0 %v141
    %v202 = vpop.f32.mrb[0].mxu0
    %v203 = vadd.f32 0.0, %v202
    %v204 = vpop.f32.mrb[0].mxu0
    %v205 = vadd.f32 0.0, %v204
    %v206 = vpop.f32.mrb[0].mxu0
    %v207 = vadd.f32 0.0, %v206
    %v208 = vpop.f32.mrb[0].mxu0
    %v209 = vadd.f32 0.0, %v208
    %210 = vmatprep.mubr.bf16.mxu0 0
    %211 = vmatmul.mubr.bf16.gmra.mrb[0].mxu0 %v144
    %v212 = vpop.f32.mrb[0].mxu0
    %v213 = vadd.f32 0.0, %v212
    %v214 = vpop.f32.mrb[0].mxu0
    %v215 = vadd.f32 0.0, %v214
    %v216 = vpop.f32.mrb[0].mxu0
    %v217 = vpop.f32.mrb[0].mxu0
    %218 = vdwg.mxu0
    %219 = vmatprep.subr.bf16.mxu0 %v107
    %220 = vmatpush1.bf16.msra.mxu0 %v106
    %221 = vmatprep.subr.bf16.mxu0 %v114
    %222 = vmatpush1.bf16.msra.mxu0 %v113
    %223 = vmatprep.subr.bf16.mxu0 %v121
    %224 = vmatpush1.bf16.msra.mxu0 %v120
    %225 = vmatprep.subr.bf16.mxu0 %v128
    %226 = vmatpush1.bf16.msra.mxu0 %v127
    %227 = vmatprep.subr.bf16.mxu0 %v157
    %228 = vmatpush1.bf16.msra.mxu0 %v154
    %229 = vmatprep.subr.bf16.mxu0 0
    %230 = vmatpush1.bf16.msra.mxu0 0
    %231 = vmatprep.subr.bf16.mxu0 0
    %232 = vmatpush1.bf16.msra.mxu0 0
    %233 = vmatprep.subr.bf16.mxu0 0
    %234 = vmatpush1.bf16.msra.mxu0 0
    %235 = vmatprep.subr.bf16.mxu0 0
    %236 = vmatpush1.bf16.msra.mxu0 0
    %237 = vmatprep.subr.bf16.mxu0 0
    %238 = vmatpush1.bf16.msra.mxu0 0
    %239 = vmatprep.subr.bf16.mxu0 0
    %240 = vmatpush1.bf16.msra.mxu0 0
    %241 = vmatprep.subr.bf16.mxu0 0
    %242 = vmatpush1.bf16.msra.mxu0 0
    %243 = vmatprep.subr.bf16.mxu0 0
    %244 = vmatpush1.bf16.msra.mxu0 0
    %245 = vmatprep.subr.bf16.mxu0 0
    %246 = vmatpush1.bf16.msra.mxu0 0
    %247 = vmatprep.subr.bf16.mxu0 0
    %248 = vmatpush1.bf16.msra.mxu0 0
    %249 = vmatprep.subr.bf16.mxu0 0
    %250 = vmatpush1.bf16.msra.mxu0 0
    %251 = vmatprep.mubr.bf16.mxu0 0
    %252 = vmatmul.mubr.bf16.gmra.mrb[0].mxu0 %v141
    %v253 = vpop.f32.mrb[0].mxu0
    %v254 = vadd.f32 0.0, %v253
    %v255 = vpop.f32.mrb[0].mxu0
    %v256 = vadd.f32 0.0, %v255
    %v257 = vpop.f32.mrb[0].mxu0
    %v258 = vadd.f32 0.0, %v257
    %v259 = vpop.f32.mrb[0].mxu0
    %v260 = vadd.f32 0.0, %v259
    %261 = vmatprep.mubr.bf16.mxu0 0
    %262 = vmatmul.mubr.bf16.gmra.mrb[0].mxu0 %v144
    %v263 = vpop.f32.mrb[0].mxu0
    %v264 = vadd.f32 0.0, %v263
    %v265 = vpop.f32.mrb[0].mxu0
    %v266 = vadd.f32 0.0, %v265
    %v267 = vpop.f32.mrb[0].mxu0
    %v268 = vpop.f32.mrb[0].mxu0
    %269 = vdwg.mxu0
    %270 = vmatprep.subr.bf16.mxu0 %v109
    %271 = vmatpush1.bf16.msra.mxu0 %v108
    %272 = vmatprep.subr.bf16.mxu0 %v116
    %273 = vmatpush1.bf16.msra.mxu0 %v115
    %274 = vmatprep.subr.bf16.mxu0 %v123
    %275 = vmatpush1.bf16.msra.mxu0 %v122
    %276 = vmatprep.subr.bf16.mxu0 %v130
    %277 = vmatpush1.bf16.msra.mxu0 %v129
    %278 = vmatprep.subr.bf16.mxu0 %v163
    %279 = vmatpush1.bf16.msra.mxu0 %v160
    %280 = vmatprep.subr.bf16.mxu0 0
    %281 = vmatpush1.bf16.msra.mxu0 0
    %282 = vmatprep.subr.bf16.mxu0 0
    %283 = vmatpush1.bf16.msra.mxu0 0
    %284 = vmatprep.subr.bf16.mxu0 0
    %285 = vmatpush1.bf16.msra.mxu0 0
    %286 = vmatprep.subr.bf16.mxu0 0
    %287 = vmatpush1.bf16.msra.mxu0 0
    %288 = vmatprep.subr.bf16.mxu0 0
    %289 = vmatpush1.bf16.msra.mxu0 0
    %290 = vmatprep.subr.bf16.mxu0 0
    %291 = vmatpush1.bf16.msra.mxu0 0
    %292 = vmatprep.subr.bf16.mxu0 0
    %293 = vmatpush1.bf16.msra.mxu0 0
    %294 = vmatprep.subr.bf16.mxu0 0
    %295 = vmatpush1.bf16.msra.mxu0 0
    %296 = vmatprep.subr.bf16.mxu0 0
    %297 = vmatpush1.bf16.msra.mxu0 0
    %298 = vmatprep.subr.bf16.mxu0 0
    %299 = vmatpush1.bf16.msra.mxu0 0
    %300 = vmatprep.subr.bf16.mxu0 0
    %301 = vmatpush1.bf16.msra.mxu0 0
    %302 = vmatprep.mubr.bf16.mxu0 0
    %303 = vmatmul.mubr.bf16.gmra.mrb[0].mxu0 %v141
    %v304 = vpop.f32.mrb[0].mxu0
    %v305 = vadd.f32 0.0, %v304
    %v306 = vpop.f32.mrb[0].mxu0
    %v307 = vadd.f32 0.0, %v306
    %v308 = vpop.f32.mrb[0].mxu0
    %v309 = vadd.f32 0.0, %v308
    %v310 = vpop.f32.mrb[0].mxu0
    %v311 = vadd.f32 0.0, %v310
    %312 = vmatprep.mubr.bf16.mxu0 0
    %313 = vmatmul.mubr.bf16.gmra.mrb[0].mxu0 %v144
    %v314 = vpop.f32.mrb[0].mxu0
    %v315 = vadd.f32 0.0, %v314
    %v316 = vpop.f32.mrb[0].mxu0
    %v317 = vadd.f32 0.0, %v316
    %v318 = vpop.f32.mrb[0].mxu0
    %v319 = vpop.f32.mrb[0].mxu0
    %320 = vdwg.mxu0
    %321 = vmatprep.subr.bf16.mxu0 0
    %322 = vmatpush1.bf16.msra.mxu0 %v110
    %323 = vmatprep.subr.bf16.mxu0 0
    %324 = vmatpush1.bf16.msra.mxu0 %v117
    %325 = vmatprep.subr.bf16.mxu0 0
    %326 = vmatpush1.bf16.msra.mxu0 %v124
    %327 = vmatprep.subr.bf16.mxu0 0
    %328 = vmatpush1.bf16.msra.mxu0 %v131
    %329 = vmatprep.subr.bf16.mxu0 0
    %330 = vmatpush1.bf16.msra.mxu0 %v166
    %331 = vmatprep.subr.bf16.mxu0 0
    %332 = vmatpush1.bf16.msra.mxu0 0
    %333 = vmatprep.subr.bf16.mxu0 0
    %334 = vmatpush1.bf16.msra.mxu0 0
    %335 = vmatprep.subr.bf16.mxu0 0
    %336 = vmatpush1.bf16.msra.mxu0 0
    %337 = vmatprep.subr.bf16.mxu0 0
    %338 = vmatpush1.bf16.msra.mxu0 0
    %339 = vmatprep.subr.bf16.mxu0 0
    %340 = vmatpush1.bf16.msra.mxu0 0
    %341 = vmatprep.subr.bf16.mxu0 0
    %342 = vmatpush1.bf16.msra.mxu0 0
    %343 = vmatprep.subr.bf16.mxu0 0
    %344 = vmatpush1.bf16.msra.mxu0 0
    %345 = vmatprep.subr.bf16.mxu0 0
    %346 = vmatpush1.bf16.msra.mxu0 0
    %347 = vmatprep.subr.bf16.mxu0 0
    %348 = vmatpush1.bf16.msra.mxu0 0
    %349 = vmatprep.subr.bf16.mxu0 0
    %350 = vmatpush1.bf16.msra.mxu0 0
    %351 = vmatprep.subr.bf16.mxu0 0
    %352 = vmatpush1.bf16.msra.mxu0 0
    %353 = vmatprep.mubr.bf16.mxu0 0
    %354 = vmatmul.mubr.bf16.gmra.mrb[0].mxu0 %v141
    %v355 = vpop.f32.mrb[0].mxu0
    %v356 = vadd.f32 0.0, %v355
    %v357 = vpop.f32.mrb[0].mxu0
    %v358 = vpop.f32.mrb[0].mxu0
    %v359 = vadd.f32 0.0, %v358
    %v360 = vpop.f32.mrb[0].mxu0
    %361 = vmatprep.mubr.bf16.mxu0 0
    %362 = vmatmul.mubr.bf16.gmra.mrb[0].mxu0 %v144
    %v363 = vpop.f32.mrb[0].mxu0
    %v364 = vadd.f32 0.0, %v363
    %v365 = vpop.f32.mrb[0].mxu0
    %v366 = vpop.f32.mrb[0].mxu0
    %v367 = vpop.f32.mrb[0].mxu0
    %368 = vdwg.mxu0
    %v369 = vadd.f32 %v203, %v205
    %v370 = vadd.f32 %v369, %v254
    %v371 = vadd.f32 %v370, %v256
    %v372 = vadd.f32 %v371, %v305
    %v373 = vadd.f32 %v372, %v307
    %vm374 = vcmask 130048
    %v375 = vsel %vm374, %v356, 0.0
    %v376 = vadd.f32 %v373, %v375
    %377 = vadd.xlane.f32.xlu0 %v376
    %v378 = vpop.xlane.xlu0 %377
    %v379 = vadd.f32 %v207, %v209
    %v380 = vadd.f32 %v379, %v258
    %v381 = vadd.f32 %v380, %v260
    %v382 = vadd.f32 %v381, %v309
    %v383 = vadd.f32 %v382, %v311
    %v384 = vsel %vm374, %v359, 0.0
    %v385 = vadd.f32 %v383, %v384
    %386 = vadd.xlane.f32.xlu0 %v385
    %v387 = vpop.xlane.xlu0 %386
    %v388 = vadd.f32 %v213, %v215
    %v389 = vadd.f32 %v388, %v264
    %v390 = vadd.f32 %v389, %v266
    %v391 = vadd.f32 %v390, %v315
    %v392 = vadd.f32 %v391, %v317
    %v393 = vsel %vm374, %v364, 0.0
    %v394 = vadd.f32 %v392, %v393
    %395 = vadd.xlane.f32.xlu0 %v394
    %v396 = vpop.xlane.xlu0 %395
    %v397 = vmul.f32 %v203, %v203
    %v398 = vmul.f32 %v205, %v205
    %v399 = vmul.f32 %v254, %v254
    %v400 = vmul.f32 %v256, %v256
    %v401 = vmul.f32 %v305, %v305
    %v402 = vmul.f32 %v307, %v307
    %v403 = vmul.f32 %v356, %v356
    %v404 = vmul.f32 %v207, %v207
    %v405 = vmul.f32 %v209, %v209
    %v406 = vmul.f32 %v258, %v258
    %v407 = vmul.f32 %v260, %v260
    %v408 = vmul.f32 %v309, %v309
    %v409 = vmul.f32 %v311, %v311
    %v410 = vmul.f32 %v359, %v359
    %v411 = vmul.f32 %v213, %v213
    %v412 = vmul.f32 %v215, %v215
    %v413 = vmul.f32 %v264, %v264
    %v414 = vmul.f32 %v266, %v266
    %v415 = vmul.f32 %v315, %v315
    %v416 = vmul.f32 %v317, %v317
    %v417 = vmul.f32 %v364, %v364
    %v418 = vadd.f32 %v397, %v398
    %v419 = vadd.f32 %v418, %v399
    %v420 = vadd.f32 %v419, %v400
    %v421 = vadd.f32 %v420, %v401
    %v422 = vadd.f32 %v421, %v402
    %v423 = vsel %vm374, %v403, 0.0
    %v424 = vadd.f32 %v422, %v423
    %425 = vadd.xlane.f32.xlu0 %v424
    %v426 = vpop.xlane.xlu0 %425
    %v427 = vadd.f32 %v404, %v405
    %v428 = vadd.f32 %v427, %v406
    %v429 = vadd.f32 %v428, %v407
    %v430 = vadd.f32 %v429, %v408
    %v431 = vadd.f32 %v430, %v409
    %v432 = vsel %vm374, %v410, 0.0
    %v433 = vadd.f32 %v431, %v432
    %434 = vadd.xlane.f32.xlu0 %v433
    %v435 = vpop.xlane.xlu0 %434
    %v436 = vadd.f32 %v411, %v412
    %v437 = vadd.f32 %v436, %v413
    %v438 = vadd.f32 %v437, %v414
    %v439 = vadd.f32 %v438, %v415
    %v440 = vadd.f32 %v439, %v416
    %v441 = vsel %vm374, %v417, 0.0
    %v442 = vadd.f32 %v440, %v441
    %443 = vadd.xlane.f32.xlu0 %v442
    %v444 = vpop.xlane.xlu0 %443
    %v445 = vmul.f32 %v378, 0.0012755102
    %v446 = vmul.f32 %v387, 0.0012755102
    %v447 = vmul.f32 %v396, 0.0012755102
    %v448 = vmul.f32 %v426, 0.0012755102
    %v449 = vmul.f32 %v435, 0.0012755102
    %v450 = vmul.f32 %v444, 0.0012755102
    %v451 = vmul.f32 %v445, %v445
    %v452 = vmul.f32 %v446, %v446
    %v453 = vmul.f32 %v447, %v447
    %v454 = vsub.f32 %v448, %v451
    %v455 = vsub.f32 %v449, %v452
    %v456 = vsub.f32 %v450, %v453
    %v457 = vmax.f32 %v454, 0.0
    %v458 = vmax.f32 %v455, 0.0
    %v459 = vmax.f32 %v456, 0.0
    %v460 = vadd.f32 %v457, 1e-05
    %v461 = vadd.f32 %v458, 1e-05
    %v462 = vadd.f32 %v459, 1e-05
    %v463 = vrsqrt.pop %v460
    %v464 = vrsqrt.pop %v461
    %v465 = vrsqrt.pop %v462
    %v466 = vld [vmem:[%s3] sm:$0xff]
    %v467 = vld [vmem:[%s3 + $0x8] sm:$0xff]
    %v468 = vld [vmem:[%s3 + $0x10] sm:$0xff]
    %v469 = vmul.f32 %v463, %v466
    %v470 = vmul.f32 %v464, %v467
    %v471 = vmul.f32 %v465, %v468
    %v472 = vmul.f32 %v445, %v469
    %v473 = vmul.f32 %v446, %v470
    %v474 = vmul.f32 %v447, %v471
    %478 = vrot.lane.b32.xlu0 %v472, 1
    %v479 = vpop.permute.xlu0 %478
    %480 = vrot.lane.b32.xlu0 %v473, 1
    %v481 = vpop.permute.xlu0 %480
    %482 = vrot.lane.b32.xlu0 %v474, 1
    %v483 = vpop.permute.xlu0 %482
    %v487 = vsub.f32 %v466, %v479
    %v488 = vsub.f32 %v467, %v481
    %v489 = vsub.f32 %v468, %v483
    %491 = vset.pattern.permute.xlu0 0
    %492 = vperm.xlu0 %491, %v469
    %v493 = vpop.permute.xlu0 %492
    %496 = vset.pattern.permute.xlu0 0
    %497 = vperm.xlu0 %496, %v470
    %v498 = vpop.permute.xlu0 %497
    %501 = vset.pattern.permute.xlu0 0
    %502 = vperm.xlu0 %501, %v471
    %v503 = vpop.permute.xlu0 %502
    %v505 = vmul.f32 %v203, %v493
    %v506 = vmul.f32 %v205, %v493
    %v507 = vmul.f32 %v254, %v493
    %v508 = vmul.f32 %v256, %v493
    %v509 = vmul.f32 %v305, %v493
    %v510 = vmul.f32 %v307, %v493
    %v511 = vmul.f32 %v356, %v493
    %v512 = vmul.f32 %v207, %v498
    %v513 = vmul.f32 %v209, %v498
    %v514 = vmul.f32 %v258, %v498
    %v515 = vmul.f32 %v260, %v498
    %v516 = vmul.f32 %v309, %v498
    %v517 = vmul.f32 %v311, %v498
    %v518 = vmul.f32 %v359, %v498
    %v519 = vmul.f32 %v213, %v503
    %v520 = vmul.f32 %v215, %v503
    %v521 = vmul.f32 %v264, %v503
    %v522 = vmul.f32 %v266, %v503
    %v523 = vmul.f32 %v315, %v503
    %v524 = vmul.f32 %v317, %v503
    %v525 = vmul.f32 %v364, %v503
    %527 = vset.pattern.permute.xlu0 1
    %528 = vperm.xlu0 %527, %v487
    %v529 = vpop.permute.xlu0 %528
    %532 = vset.pattern.permute.xlu0 1
    %533 = vperm.xlu0 %532, %v488
    %v534 = vpop.permute.xlu0 %533
    %537 = vset.pattern.permute.xlu0 1
    %538 = vperm.xlu0 %537, %v489
    %v539 = vpop.permute.xlu0 %538
    %v541 = vadd.f32 %v505, %v529
    %v542 = vadd.f32 %v506, %v529
    %v543 = vadd.f32 %v507, %v529
    %v544 = vadd.f32 %v508, %v529
    %v545 = vadd.f32 %v509, %v529
    %v546 = vadd.f32 %v510, %v529
    %v547 = vadd.f32 %v511, %v529
    %v548 = vadd.f32 %v512, %v534
    %v549 = vadd.f32 %v513, %v534
    %v550 = vadd.f32 %v514, %v534
    %v551 = vadd.f32 %v515, %v534
    %v552 = vadd.f32 %v516, %v534
    %v553 = vadd.f32 %v517, %v534
    %v554 = vadd.f32 %v518, %v534
    %v555 = vadd.f32 %v519, %v539
    %v556 = vadd.f32 %v520, %v539
    %v557 = vadd.f32 %v521, %v539
    %v558 = vadd.f32 %v522, %v539
    %v559 = vadd.f32 %v523, %v539
    %v560 = vadd.f32 %v524, %v539
    %v561 = vadd.f32 %v525, %v539
    %v562 = vld [vmem:[%s1] sm:$0xff]
    %v563 = vld [vmem:[%s1 + $0x8] sm:$0xff]
    %v564 = vld [vmem:[%s1 + $0x10] sm:$0xff]
    %v565 = vld [vmem:[%s1 + $0x18] sm:$0xff]
    %v566 = vld [vmem:[%s1 + $0x20] sm:$0xff]
    %v567 = vld [vmem:[%s1 + $0x28] sm:$0xff]
    %v568 = vld [vmem:[%s1 + $0x30] sm:$0xff]
    %v569 = vld [vmem:[%s1 + $0x38] sm:$0xff]
    %v570 = vld [vmem:[%s1 + $0x40] sm:$0xff]
    %v571 = vld [vmem:[%s1 + $0x48] sm:$0xff]
    %v572 = vld [vmem:[%s1 + $0x50] sm:$0xff]
    %v573 = vld [vmem:[%s1 + $0x58] sm:$0xff]
    %v574 = vld [vmem:[%s1 + $0x60] sm:$0xff]
    %v575 = vld [vmem:[%s1 + $0x68] sm:$0xff]
    %v576 = vld [vmem:[%s1 + $0x70] sm:$0xff]
    %v577 = vld [vmem:[%s1 + $0x78] sm:$0xff]
    %v578 = vld [vmem:[%s1 + $0x80] sm:$0xff]
    %v579 = vld [vmem:[%s1 + $0x88] sm:$0xff]
    %v580 = vld [vmem:[%s1 + $0x90] sm:$0xff]
    %v581 = vld [vmem:[%s1 + $0x98] sm:$0xff]
    %v582 = vld [vmem:[%s1 + $0xa0] sm:$0xff]
    %v583 = vadd.f32 %v541, %v562
    %v584 = vadd.f32 %v542, %v563
    %v585 = vadd.f32 %v543, %v564
    %v586 = vadd.f32 %v544, %v565
    %v587 = vadd.f32 %v545, %v566
    %v588 = vadd.f32 %v546, %v567
    %v589 = vadd.f32 %v547, %v568
    %v590 = vadd.f32 %v548, %v569
    %v591 = vadd.f32 %v549, %v570
    %v592 = vadd.f32 %v550, %v571
    %v593 = vadd.f32 %v551, %v572
    %v594 = vadd.f32 %v552, %v573
    %v595 = vadd.f32 %v553, %v574
    %v596 = vadd.f32 %v554, %v575
    %v597 = vadd.f32 %v555, %v576
    %v598 = vadd.f32 %v556, %v577
    %v599 = vadd.f32 %v557, %v578
    %v600 = vadd.f32 %v558, %v579
    %v601 = vadd.f32 %v559, %v580
    %v602 = vadd.f32 %v560, %v581
    %v603 = vadd.f32 %v561, %v582
    %v604 = vld [vmem:[%s4] sm:$0xff]
    %v605 = vld [vmem:[%s4 + $0x8] sm:$0xff]
    %v606 = vld [vmem:[%s4 + $0x10] sm:$0xff]
    %v607 = vld [vmem:[%s4 + $0x18] sm:$0xff]
    %v608 = vld [vmem:[%s4 + $0x20] sm:$0xff]
    %v609 = vld [vmem:[%s4 + $0x28] sm:$0xff]
    %v610 = vld [vmem:[%s4 + $0x30] sm:$0xff]
    %v611 = vld [vmem:[%s4 + $0x38] sm:$0xff]
    %v612 = vld [vmem:[%s4 + $0x40] sm:$0xff]
    %v613 = vld [vmem:[%s4 + $0x48] sm:$0xff]
    %v614 = vld [vmem:[%s4 + $0x50] sm:$0xff]
    %v615 = vld [vmem:[%s4 + $0x58] sm:$0xff]
    %v616 = vld [vmem:[%s4 + $0x60] sm:$0xff]
    %v617 = vld [vmem:[%s4 + $0x68] sm:$0xff]
    %v618 = vld [vmem:[%s4 + $0x70] sm:$0xff]
    %v619 = vld [vmem:[%s4 + $0x78] sm:$0xff]
    %v620 = vld [vmem:[%s4 + $0x80] sm:$0xff]
    %v621 = vld [vmem:[%s4 + $0x88] sm:$0xff]
    %v622 = vpack.c.bf16 %v605, %v604
    %v623 = vpack.c.bf16 %v607, %v606
    %v624 = vpack.c.bf16 %v609, %v608
    %v625 = vpack.c.bf16 %v611, %v610
    %v626 = vpack.c.bf16 %v613, %v612
    %v627 = vpack.c.bf16 %v615, %v614
    %v628 = vpack.c.bf16 %v617, %v616
    %v629 = vpack.c.bf16 %v619, %v618
    %v630 = vpack.c.bf16 %v621, %v620
    %v631 = vpack.c.bf16 %v590, %v583
    %v632 = vpack.c.bf16 %v591, %v584
    %v633 = vpack.c.bf16 %v592, %v585
    %v634 = vpack.c.bf16 %v593, %v586
    %v635 = vpack.c.bf16 %v594, %v587
    %v636 = vpack.c.bf16 %v595, %v588
    %v637 = vpack.c.bf16 %v596, %v589
    %v638 = vpack.c.bf16 %v597, %v597
    %v639 = vpack.c.bf16 %v598, %v598
    %v640 = vpack.c.bf16 %v599, %v599
    %v641 = vpack.c.bf16 %v600, %v600
    %v642 = vpack.c.bf16 %v601, %v601
    %v643 = vpack.c.bf16 %v602, %v602
    %v644 = vpack.c.bf16 %v603, %v603
    %vm645 = vcmask 195584
    %v647 = vsel %vm645, %v622, 0
    %v650 = vsel %vm645, %v623, 0
    %v653 = vsel %vm645, %v624, 0
    %v656 = vsel %vm645, %v625, 0
    %v659 = vsel %vm645, %v626, 0
    %v662 = vsel %vm645, %v627, 0
    %v665 = vsel %vm645, %v628, 0
    %v668 = vsel %vm645, %v629, 0
    %v671 = vsel %vm645, %v630, 0
    %v674 = vsel %vm146, %v638, 0
    %v677 = vsel %vm146, %v639, 0
    %v680 = vsel %vm146, %v640, 0
    %v683 = vsel %vm146, %v641, 0
    %v686 = vsel %vm146, %v642, 0
    %v689 = vsel %vm146, %v643, 0
    %v692 = vsel %vm146, %v644, 0
    %694 = vmatprep.subr.bf16.mxu0 %v632
    %695 = vmatpush1.bf16.msra.mxu0 %v631
    %696 = vmatprep.subr.bf16.mxu0 %v677
    %697 = vmatpush1.bf16.msra.mxu0 %v674
    %698 = vmatprep.subr.bf16.mxu0 0
    %699 = vmatpush1.bf16.msra.mxu0 0
    %700 = vmatprep.subr.bf16.mxu0 0
    %701 = vmatpush1.bf16.msra.mxu0 0
    %702 = vmatprep.subr.bf16.mxu0 0
    %703 = vmatpush1.bf16.msra.mxu0 0
    %704 = vmatprep.subr.bf16.mxu0 0
    %705 = vmatpush1.bf16.msra.mxu0 0
    %706 = vmatprep.subr.bf16.mxu0 0
    %707 = vmatpush1.bf16.msra.mxu0 0
    %708 = vmatprep.subr.bf16.mxu0 0
    %709 = vmatpush1.bf16.msra.mxu0 0
    %710 = vmatprep.subr.bf16.mxu0 0
    %711 = vmatpush1.bf16.msra.mxu0 0
    %712 = vmatprep.subr.bf16.mxu0 0
    %713 = vmatpush1.bf16.msra.mxu0 0
    %714 = vmatprep.subr.bf16.mxu0 0
    %715 = vmatpush1.bf16.msra.mxu0 0
    %716 = vmatprep.subr.bf16.mxu0 0
    %717 = vmatpush1.bf16.msra.mxu0 0
    %718 = vmatprep.subr.bf16.mxu0 0
    %719 = vmatpush1.bf16.msra.mxu0 0
    %720 = vmatprep.subr.bf16.mxu0 0
    %721 = vmatpush1.bf16.msra.mxu0 0
    %722 = vmatprep.subr.bf16.mxu0 0
    %723 = vmatpush1.bf16.msra.mxu0 0
    %724 = vmatprep.subr.bf16.mxu0 0
    %725 = vmatpush1.bf16.msra.mxu0 0
    %726 = vmatprep.mubr.bf16.mxu0 0
    %727 = vmatmul.mubr.bf16.gmra.mrb[0].mxu0 %v647
    %v728 = vpop.f32.mrb[0].mxu0
    %v729 = vadd.f32 0.0, %v728
    %v730 = vpop.f32.mrb[0].mxu0
    %v731 = vadd.f32 0.0, %v730
    %v732 = vpop.f32.mrb[0].mxu0
    %v733 = vadd.f32 0.0, %v732
    %v734 = vpop.f32.mrb[0].mxu0
    %v735 = vadd.f32 0.0, %v734
    %736 = vmatprep.mubr.bf16.mxu0 0
    %737 = vmatmul.mubr.bf16.gmra.mrb[0].mxu0 %v650
    %v738 = vpop.f32.mrb[0].mxu0
    %v739 = vadd.f32 0.0, %v738
    %v740 = vpop.f32.mrb[0].mxu0
    %v741 = vadd.f32 0.0, %v740
    %v742 = vpop.f32.mrb[0].mxu0
    %v743 = vadd.f32 0.0, %v742
    %v744 = vpop.f32.mrb[0].mxu0
    %v745 = vadd.f32 0.0, %v744
    %746 = vmatprep.mubr.bf16.mxu0 0
    %747 = vmatmul.mubr.bf16.gmra.mrb[0].mxu0 %v653
    %v748 = vpop.f32.mrb[0].mxu0
    %v749 = vadd.f32 0.0, %v748
    %v750 = vpop.f32.mrb[0].mxu0
    %v751 = vadd.f32 0.0, %v750
    %v752 = vpop.f32.mrb[0].mxu0
    %v753 = vadd.f32 0.0, %v752
    %v754 = vpop.f32.mrb[0].mxu0
    %v755 = vadd.f32 0.0, %v754
    %756 = vmatprep.mubr.bf16.mxu0 0
    %757 = vmatmul.mubr.bf16.gmra.mrb[0].mxu0 %v656
    %v758 = vpop.f32.mrb[0].mxu0
    %v759 = vadd.f32 0.0, %v758
    %v760 = vpop.f32.mrb[0].mxu0
    %v761 = vadd.f32 0.0, %v760
    %v762 = vpop.f32.mrb[0].mxu0
    %v763 = vadd.f32 0.0, %v762
    %v764 = vpop.f32.mrb[0].mxu0
    %v765 = vadd.f32 0.0, %v764
    %766 = vmatprep.mubr.bf16.mxu0 0
    %767 = vmatmul.mubr.bf16.gmra.mrb[0].mxu0 %v659
    %v768 = vpop.f32.mrb[0].mxu0
    %v769 = vadd.f32 0.0, %v768
    %v770 = vpop.f32.mrb[0].mxu0
    %v771 = vadd.f32 0.0, %v770
    %v772 = vpop.f32.mrb[0].mxu0
    %v773 = vadd.f32 0.0, %v772
    %v774 = vpop.f32.mrb[0].mxu0
    %v775 = vadd.f32 0.0, %v774
    %776 = vmatprep.mubr.bf16.mxu0 0
    %777 = vmatmul.mubr.bf16.gmra.mrb[0].mxu0 %v662
    %v778 = vpop.f32.mrb[0].mxu0
    %v779 = vadd.f32 0.0, %v778
    %v780 = vpop.f32.mrb[0].mxu0
    %v781 = vadd.f32 0.0, %v780
    %v782 = vpop.f32.mrb[0].mxu0
    %v783 = vadd.f32 0.0, %v782
    %v784 = vpop.f32.mrb[0].mxu0
    %v785 = vadd.f32 0.0, %v784
    %786 = vmatprep.mubr.bf16.mxu0 0
    %787 = vmatmul.mubr.bf16.gmra.mrb[0].mxu0 %v665
    %v788 = vpop.f32.mrb[0].mxu0
    %v789 = vadd.f32 0.0, %v788
    %v790 = vpop.f32.mrb[0].mxu0
    %v791 = vadd.f32 0.0, %v790
    %v792 = vpop.f32.mrb[0].mxu0
    %v793 = vadd.f32 0.0, %v792
    %v794 = vpop.f32.mrb[0].mxu0
    %v795 = vadd.f32 0.0, %v794
    %796 = vmatprep.mubr.bf16.mxu0 0
    %797 = vmatmul.mubr.bf16.gmra.mrb[0].mxu0 %v668
    %v798 = vpop.f32.mrb[0].mxu0
    %v799 = vadd.f32 0.0, %v798
    %v800 = vpop.f32.mrb[0].mxu0
    %v801 = vadd.f32 0.0, %v800
    %v802 = vpop.f32.mrb[0].mxu0
    %v803 = vadd.f32 0.0, %v802
    %v804 = vpop.f32.mrb[0].mxu0
    %v805 = vadd.f32 0.0, %v804
    %806 = vmatprep.mubr.bf16.mxu0 0
    %807 = vmatmul.mubr.bf16.gmra.mrb[0].mxu0 %v671
    %v808 = vpop.f32.mrb[0].mxu0
    %v809 = vadd.f32 0.0, %v808
    %v810 = vpop.f32.mrb[0].mxu0
    %v811 = vadd.f32 0.0, %v810
    %v812 = vpop.f32.mrb[0].mxu0
    %v813 = vadd.f32 0.0, %v812
    %v814 = vpop.f32.mrb[0].mxu0
    %v815 = vadd.f32 0.0, %v814
    %816 = vdwg.mxu0
    %817 = vmatprep.subr.bf16.mxu0 %v634
    %818 = vmatpush1.bf16.msra.mxu0 %v633
    %819 = vmatprep.subr.bf16.mxu0 %v683
    %820 = vmatpush1.bf16.msra.mxu0 %v680
    %821 = vmatprep.subr.bf16.mxu0 0
    %822 = vmatpush1.bf16.msra.mxu0 0
    %823 = vmatprep.subr.bf16.mxu0 0
    %824 = vmatpush1.bf16.msra.mxu0 0
    %825 = vmatprep.subr.bf16.mxu0 0
    %826 = vmatpush1.bf16.msra.mxu0 0
    %827 = vmatprep.subr.bf16.mxu0 0
    %828 = vmatpush1.bf16.msra.mxu0 0
    %829 = vmatprep.subr.bf16.mxu0 0
    %830 = vmatpush1.bf16.msra.mxu0 0
    %831 = vmatprep.subr.bf16.mxu0 0
    %832 = vmatpush1.bf16.msra.mxu0 0
    %833 = vmatprep.subr.bf16.mxu0 0
    %834 = vmatpush1.bf16.msra.mxu0 0
    %835 = vmatprep.subr.bf16.mxu0 0
    %836 = vmatpush1.bf16.msra.mxu0 0
    %837 = vmatprep.subr.bf16.mxu0 0
    %838 = vmatpush1.bf16.msra.mxu0 0
    %839 = vmatprep.subr.bf16.mxu0 0
    %840 = vmatpush1.bf16.msra.mxu0 0
    %841 = vmatprep.subr.bf16.mxu0 0
    %842 = vmatpush1.bf16.msra.mxu0 0
    %843 = vmatprep.subr.bf16.mxu0 0
    %844 = vmatpush1.bf16.msra.mxu0 0
    %845 = vmatprep.subr.bf16.mxu0 0
    %846 = vmatpush1.bf16.msra.mxu0 0
    %847 = vmatprep.subr.bf16.mxu0 0
    %848 = vmatpush1.bf16.msra.mxu0 0
    %849 = vmatprep.mubr.bf16.mxu0 0
    %850 = vmatmul.mubr.bf16.gmra.mrb[0].mxu0 %v647
    %v851 = vpop.f32.mrb[0].mxu0
    %v852 = vadd.f32 0.0, %v851
    %v853 = vpop.f32.mrb[0].mxu0
    %v854 = vadd.f32 0.0, %v853
    %v855 = vpop.f32.mrb[0].mxu0
    %v856 = vadd.f32 0.0, %v855
    %v857 = vpop.f32.mrb[0].mxu0
    %v858 = vadd.f32 0.0, %v857
    %859 = vmatprep.mubr.bf16.mxu0 0
    %860 = vmatmul.mubr.bf16.gmra.mrb[0].mxu0 %v650
    %v861 = vpop.f32.mrb[0].mxu0
    %v862 = vadd.f32 0.0, %v861
    %v863 = vpop.f32.mrb[0].mxu0
    %v864 = vadd.f32 0.0, %v863
    %v865 = vpop.f32.mrb[0].mxu0
    %v866 = vadd.f32 0.0, %v865
    %v867 = vpop.f32.mrb[0].mxu0
    %v868 = vadd.f32 0.0, %v867
    %869 = vmatprep.mubr.bf16.mxu0 0
    %870 = vmatmul.mubr.bf16.gmra.mrb[0].mxu0 %v653
    %v871 = vpop.f32.mrb[0].mxu0
    %v872 = vadd.f32 0.0, %v871
    %v873 = vpop.f32.mrb[0].mxu0
    %v874 = vadd.f32 0.0, %v873
    %v875 = vpop.f32.mrb[0].mxu0
    %v876 = vadd.f32 0.0, %v875
    %v877 = vpop.f32.mrb[0].mxu0
    %v878 = vadd.f32 0.0, %v877
    %879 = vmatprep.mubr.bf16.mxu0 0
    %880 = vmatmul.mubr.bf16.gmra.mrb[0].mxu0 %v656
    %v881 = vpop.f32.mrb[0].mxu0
    %v882 = vadd.f32 0.0, %v881
    %v883 = vpop.f32.mrb[0].mxu0
    %v884 = vadd.f32 0.0, %v883
    %v885 = vpop.f32.mrb[0].mxu0
    %v886 = vadd.f32 0.0, %v885
    %v887 = vpop.f32.mrb[0].mxu0
    %v888 = vadd.f32 0.0, %v887
    %889 = vmatprep.mubr.bf16.mxu0 0
    %890 = vmatmul.mubr.bf16.gmra.mrb[0].mxu0 %v659
    %v891 = vpop.f32.mrb[0].mxu0
    %v892 = vadd.f32 0.0, %v891
    %v893 = vpop.f32.mrb[0].mxu0
    %v894 = vadd.f32 0.0, %v893
    %v895 = vpop.f32.mrb[0].mxu0
    %v896 = vadd.f32 0.0, %v895
    %v897 = vpop.f32.mrb[0].mxu0
    %v898 = vadd.f32 0.0, %v897
    %899 = vmatprep.mubr.bf16.mxu0 0
    %900 = vmatmul.mubr.bf16.gmra.mrb[0].mxu0 %v662
    %v901 = vpop.f32.mrb[0].mxu0
    %v902 = vadd.f32 0.0, %v901
    %v903 = vpop.f32.mrb[0].mxu0
    %v904 = vadd.f32 0.0, %v903
    %v905 = vpop.f32.mrb[0].mxu0
    %v906 = vadd.f32 0.0, %v905
    %v907 = vpop.f32.mrb[0].mxu0
    %v908 = vadd.f32 0.0, %v907
    %909 = vmatprep.mubr.bf16.mxu0 0
    %910 = vmatmul.mubr.bf16.gmra.mrb[0].mxu0 %v665
    %v911 = vpop.f32.mrb[0].mxu0
    %v912 = vadd.f32 0.0, %v911
    %v913 = vpop.f32.mrb[0].mxu0
    %v914 = vadd.f32 0.0, %v913
    %v915 = vpop.f32.mrb[0].mxu0
    %v916 = vadd.f32 0.0, %v915
    %v917 = vpop.f32.mrb[0].mxu0
    %v918 = vadd.f32 0.0, %v917
    %919 = vmatprep.mubr.bf16.mxu0 0
    %920 = vmatmul.mubr.bf16.gmra.mrb[0].mxu0 %v668
    %v921 = vpop.f32.mrb[0].mxu0
    %v922 = vadd.f32 0.0, %v921
    %v923 = vpop.f32.mrb[0].mxu0
    %v924 = vadd.f32 0.0, %v923
    %v925 = vpop.f32.mrb[0].mxu0
    %v926 = vadd.f32 0.0, %v925
    %v927 = vpop.f32.mrb[0].mxu0
    %v928 = vadd.f32 0.0, %v927
    %929 = vmatprep.mubr.bf16.mxu0 0
    %930 = vmatmul.mubr.bf16.gmra.mrb[0].mxu0 %v671
    %v931 = vpop.f32.mrb[0].mxu0
    %v932 = vadd.f32 0.0, %v931
    %v933 = vpop.f32.mrb[0].mxu0
    %v934 = vadd.f32 0.0, %v933
    %v935 = vpop.f32.mrb[0].mxu0
    %v936 = vadd.f32 0.0, %v935
    %v937 = vpop.f32.mrb[0].mxu0
    %v938 = vadd.f32 0.0, %v937
    %939 = vdwg.mxu0
    %940 = vmatprep.subr.bf16.mxu0 %v636
    %941 = vmatpush1.bf16.msra.mxu0 %v635
    %942 = vmatprep.subr.bf16.mxu0 %v689
    %943 = vmatpush1.bf16.msra.mxu0 %v686
    %944 = vmatprep.subr.bf16.mxu0 0
    %945 = vmatpush1.bf16.msra.mxu0 0
    %946 = vmatprep.subr.bf16.mxu0 0
    %947 = vmatpush1.bf16.msra.mxu0 0
    %948 = vmatprep.subr.bf16.mxu0 0
    %949 = vmatpush1.bf16.msra.mxu0 0
    %950 = vmatprep.subr.bf16.mxu0 0
    %951 = vmatpush1.bf16.msra.mxu0 0
    %952 = vmatprep.subr.bf16.mxu0 0
    %953 = vmatpush1.bf16.msra.mxu0 0
    %954 = vmatprep.subr.bf16.mxu0 0
    %955 = vmatpush1.bf16.msra.mxu0 0
    %956 = vmatprep.subr.bf16.mxu0 0
    %957 = vmatpush1.bf16.msra.mxu0 0
    %958 = vmatprep.subr.bf16.mxu0 0
    %959 = vmatpush1.bf16.msra.mxu0 0
    %960 = vmatprep.subr.bf16.mxu0 0
    %961 = vmatpush1.bf16.msra.mxu0 0
    %962 = vmatprep.subr.bf16.mxu0 0
    %963 = vmatpush1.bf16.msra.mxu0 0
    %964 = vmatprep.subr.bf16.mxu0 0
    %965 = vmatpush1.bf16.msra.mxu0 0
    %966 = vmatprep.subr.bf16.mxu0 0
    %967 = vmatpush1.bf16.msra.mxu0 0
    %968 = vmatprep.subr.bf16.mxu0 0
    %969 = vmatpush1.bf16.msra.mxu0 0
    %970 = vmatprep.subr.bf16.mxu0 0
    %971 = vmatpush1.bf16.msra.mxu0 0
    %972 = vmatprep.mubr.bf16.mxu0 0
    %973 = vmatmul.mubr.bf16.gmra.mrb[0].mxu0 %v647
    %v974 = vpop.f32.mrb[0].mxu0
    %v975 = vadd.f32 0.0, %v974
    %v976 = vpop.f32.mrb[0].mxu0
    %v977 = vadd.f32 0.0, %v976
    %v978 = vpop.f32.mrb[0].mxu0
    %v979 = vadd.f32 0.0, %v978
    %v980 = vpop.f32.mrb[0].mxu0
    %v981 = vadd.f32 0.0, %v980
    %982 = vmatprep.mubr.bf16.mxu0 0
    %983 = vmatmul.mubr.bf16.gmra.mrb[0].mxu0 %v650
    %v984 = vpop.f32.mrb[0].mxu0
    %v985 = vadd.f32 0.0, %v984
    %v986 = vpop.f32.mrb[0].mxu0
    %v987 = vadd.f32 0.0, %v986
    %v988 = vpop.f32.mrb[0].mxu0
    %v989 = vadd.f32 0.0, %v988
    %v990 = vpop.f32.mrb[0].mxu0
    %v991 = vadd.f32 0.0, %v990
    %992 = vmatprep.mubr.bf16.mxu0 0
    %993 = vmatmul.mubr.bf16.gmra.mrb[0].mxu0 %v653
    %v994 = vpop.f32.mrb[0].mxu0
    %v995 = vadd.f32 0.0, %v994
    %v996 = vpop.f32.mrb[0].mxu0
    %v997 = vadd.f32 0.0, %v996
    %v998 = vpop.f32.mrb[0].mxu0
    %v999 = vadd.f32 0.0, %v998
    %v1000 = vpop.f32.mrb[0].mxu0
    %v1001 = vadd.f32 0.0, %v1000
    %1002 = vmatprep.mubr.bf16.mxu0 0
    %1003 = vmatmul.mubr.bf16.gmra.mrb[0].mxu0 %v656
    %v1004 = vpop.f32.mrb[0].mxu0
    %v1005 = vadd.f32 0.0, %v1004
    %v1006 = vpop.f32.mrb[0].mxu0
    %v1007 = vadd.f32 0.0, %v1006
    %v1008 = vpop.f32.mrb[0].mxu0
    %v1009 = vadd.f32 0.0, %v1008
    %v1010 = vpop.f32.mrb[0].mxu0
    %v1011 = vadd.f32 0.0, %v1010
    %1012 = vmatprep.mubr.bf16.mxu0 0
    %1013 = vmatmul.mubr.bf16.gmra.mrb[0].mxu0 %v659
    %v1014 = vpop.f32.mrb[0].mxu0
    %v1015 = vadd.f32 0.0, %v1014
    %v1016 = vpop.f32.mrb[0].mxu0
    %v1017 = vadd.f32 0.0, %v1016
    %v1018 = vpop.f32.mrb[0].mxu0
    %v1019 = vadd.f32 0.0, %v1018
    %v1020 = vpop.f32.mrb[0].mxu0
    %v1021 = vadd.f32 0.0, %v1020
    %1022 = vmatprep.mubr.bf16.mxu0 0
    %1023 = vmatmul.mubr.bf16.gmra.mrb[0].mxu0 %v662
    %v1024 = vpop.f32.mrb[0].mxu0
    %v1025 = vadd.f32 0.0, %v1024
    %v1026 = vpop.f32.mrb[0].mxu0
    %v1027 = vadd.f32 0.0, %v1026
    %v1028 = vpop.f32.mrb[0].mxu0
    %v1029 = vadd.f32 0.0, %v1028
    %v1030 = vpop.f32.mrb[0].mxu0
    %v1031 = vadd.f32 0.0, %v1030
    %1032 = vmatprep.mubr.bf16.mxu0 0
    %1033 = vmatmul.mubr.bf16.gmra.mrb[0].mxu0 %v665
    %v1034 = vpop.f32.mrb[0].mxu0
    %v1035 = vadd.f32 0.0, %v1034
    %v1036 = vpop.f32.mrb[0].mxu0
    %v1037 = vadd.f32 0.0, %v1036
    %v1038 = vpop.f32.mrb[0].mxu0
    %v1039 = vadd.f32 0.0, %v1038
    %v1040 = vpop.f32.mrb[0].mxu0
    %v1041 = vadd.f32 0.0, %v1040
    %1042 = vmatprep.mubr.bf16.mxu0 0
    %1043 = vmatmul.mubr.bf16.gmra.mrb[0].mxu0 %v668
    %v1044 = vpop.f32.mrb[0].mxu0
    %v1045 = vadd.f32 0.0, %v1044
    %v1046 = vpop.f32.mrb[0].mxu0
    %v1047 = vadd.f32 0.0, %v1046
    %v1048 = vpop.f32.mrb[0].mxu0
    %v1049 = vadd.f32 0.0, %v1048
    %v1050 = vpop.f32.mrb[0].mxu0
    %v1051 = vadd.f32 0.0, %v1050
    %1052 = vmatprep.mubr.bf16.mxu0 0
    %1053 = vmatmul.mubr.bf16.gmra.mrb[0].mxu0 %v671
    %v1054 = vpop.f32.mrb[0].mxu0
    %v1055 = vadd.f32 0.0, %v1054
    %v1056 = vpop.f32.mrb[0].mxu0
    %v1057 = vadd.f32 0.0, %v1056
    %v1058 = vpop.f32.mrb[0].mxu0
    %v1059 = vadd.f32 0.0, %v1058
    %v1060 = vpop.f32.mrb[0].mxu0
    %v1061 = vadd.f32 0.0, %v1060
    %1062 = vdwg.mxu0
    %1063 = vmatprep.subr.bf16.mxu0 0
    %1064 = vmatpush1.bf16.msra.mxu0 %v637
    %1065 = vmatprep.subr.bf16.mxu0 0
    %1066 = vmatpush1.bf16.msra.mxu0 %v692
    %1067 = vmatprep.subr.bf16.mxu0 0
    %1068 = vmatpush1.bf16.msra.mxu0 0
    %1069 = vmatprep.subr.bf16.mxu0 0
    %1070 = vmatpush1.bf16.msra.mxu0 0
    %1071 = vmatprep.subr.bf16.mxu0 0
    %1072 = vmatpush1.bf16.msra.mxu0 0
    %1073 = vmatprep.subr.bf16.mxu0 0
    %1074 = vmatpush1.bf16.msra.mxu0 0
    %1075 = vmatprep.subr.bf16.mxu0 0
    %1076 = vmatpush1.bf16.msra.mxu0 0
    %1077 = vmatprep.subr.bf16.mxu0 0
    %1078 = vmatpush1.bf16.msra.mxu0 0
    %1079 = vmatprep.subr.bf16.mxu0 0
    %1080 = vmatpush1.bf16.msra.mxu0 0
    %1081 = vmatprep.subr.bf16.mxu0 0
    %1082 = vmatpush1.bf16.msra.mxu0 0
    %1083 = vmatprep.subr.bf16.mxu0 0
    %1084 = vmatpush1.bf16.msra.mxu0 0
    %1085 = vmatprep.subr.bf16.mxu0 0
    %1086 = vmatpush1.bf16.msra.mxu0 0
    %1087 = vmatprep.subr.bf16.mxu0 0
    %1088 = vmatpush1.bf16.msra.mxu0 0
    %1089 = vmatprep.subr.bf16.mxu0 0
    %1090 = vmatpush1.bf16.msra.mxu0 0
    %1091 = vmatprep.subr.bf16.mxu0 0
    %1092 = vmatpush1.bf16.msra.mxu0 0
    %1093 = vmatprep.subr.bf16.mxu0 0
    %1094 = vmatpush1.bf16.msra.mxu0 0
    %1095 = vmatprep.mubr.bf16.mxu0 0
    %1096 = vmatmul.mubr.bf16.gmra.mrb[0].mxu0 %v647
    %v1097 = vpop.f32.mrb[0].mxu0
    %v1098 = vadd.f32 0.0, %v1097
    %v1099 = vpop.f32.mrb[0].mxu0
    %v1100 = vpop.f32.mrb[0].mxu0
    %v1101 = vadd.f32 0.0, %v1100
    %v1102 = vpop.f32.mrb[0].mxu0
    %1103 = vmatprep.mubr.bf16.mxu0 0
    %1104 = vmatmul.mubr.bf16.gmra.mrb[0].mxu0 %v650
    %v1105 = vpop.f32.mrb[0].mxu0
    %v1106 = vadd.f32 0.0, %v1105
    %v1107 = vpop.f32.mrb[0].mxu0
    %v1108 = vpop.f32.mrb[0].mxu0
    %v1109 = vadd.f32 0.0, %v1108
    %v1110 = vpop.f32.mrb[0].mxu0
    %1111 = vmatprep.mubr.bf16.mxu0 0
    %1112 = vmatmul.mubr.bf16.gmra.mrb[0].mxu0 %v653
    %v1113 = vpop.f32.mrb[0].mxu0
    %v1114 = vadd.f32 0.0, %v1113
    %v1115 = vpop.f32.mrb[0].mxu0
    %v1116 = vpop.f32.mrb[0].mxu0
    %v1117 = vadd.f32 0.0, %v1116
    %v1118 = vpop.f32.mrb[0].mxu0
    %1119 = vmatprep.mubr.bf16.mxu0 0
    %1120 = vmatmul.mubr.bf16.gmra.mrb[0].mxu0 %v656
    %v1121 = vpop.f32.mrb[0].mxu0
    %v1122 = vadd.f32 0.0, %v1121
    %v1123 = vpop.f32.mrb[0].mxu0
    %v1124 = vpop.f32.mrb[0].mxu0
    %v1125 = vadd.f32 0.0, %v1124
    %v1126 = vpop.f32.mrb[0].mxu0
    %1127 = vmatprep.mubr.bf16.mxu0 0
    %1128 = vmatmul.mubr.bf16.gmra.mrb[0].mxu0 %v659
    %v1129 = vpop.f32.mrb[0].mxu0
    %v1130 = vadd.f32 0.0, %v1129
    %v1131 = vpop.f32.mrb[0].mxu0
    %v1132 = vpop.f32.mrb[0].mxu0
    %v1133 = vadd.f32 0.0, %v1132
    %v1134 = vpop.f32.mrb[0].mxu0
    %1135 = vmatprep.mubr.bf16.mxu0 0
    %1136 = vmatmul.mubr.bf16.gmra.mrb[0].mxu0 %v662
    %v1137 = vpop.f32.mrb[0].mxu0
    %v1138 = vadd.f32 0.0, %v1137
    %v1139 = vpop.f32.mrb[0].mxu0
    %v1140 = vpop.f32.mrb[0].mxu0
    %v1141 = vadd.f32 0.0, %v1140
    %v1142 = vpop.f32.mrb[0].mxu0
    %1143 = vmatprep.mubr.bf16.mxu0 0
    %1144 = vmatmul.mubr.bf16.gmra.mrb[0].mxu0 %v665
    %v1145 = vpop.f32.mrb[0].mxu0
    %v1146 = vadd.f32 0.0, %v1145
    %v1147 = vpop.f32.mrb[0].mxu0
    %v1148 = vpop.f32.mrb[0].mxu0
    %v1149 = vadd.f32 0.0, %v1148
    %v1150 = vpop.f32.mrb[0].mxu0
    %1151 = vmatprep.mubr.bf16.mxu0 0
    %1152 = vmatmul.mubr.bf16.gmra.mrb[0].mxu0 %v668
    %v1153 = vpop.f32.mrb[0].mxu0
    %v1154 = vadd.f32 0.0, %v1153
    %v1155 = vpop.f32.mrb[0].mxu0
    %v1156 = vpop.f32.mrb[0].mxu0
    %v1157 = vadd.f32 0.0, %v1156
    %v1158 = vpop.f32.mrb[0].mxu0
    %1159 = vmatprep.mubr.bf16.mxu0 0
    %1160 = vmatmul.mubr.bf16.gmra.mrb[0].mxu0 %v671
    %v1161 = vpop.f32.mrb[0].mxu0
    %v1162 = vadd.f32 0.0, %v1161
    %v1163 = vpop.f32.mrb[0].mxu0
    %v1164 = vpop.f32.mrb[0].mxu0
    %v1165 = vadd.f32 0.0, %v1164
    %v1166 = vpop.f32.mrb[0].mxu0
    %1167 = vdwg.mxu0
    %1168 = vst [vmem:[#allocation5] sm:$0xff] %v729
    %1169 = vst [vmem:[#allocation5 + $0x8] sm:$0xff] %v731
    %1170 = vst [vmem:[#allocation5 + $0x10] sm:$0xff] %v852
    %1171 = vst [vmem:[#allocation5 + $0x18] sm:$0xff] %v854
    %1172 = vst [vmem:[#allocation5 + $0x20] sm:$0xff] %v975
    %1173 = vst [vmem:[#allocation5 + $0x28] sm:$0xff] %v977
    %1174 = vst.msk [vmem:[#allocation5 + $0x30] sm:$0xff] %vm374, %v1098
    %1175 = vst [vmem:[#allocation5 + $0x38] sm:$0xff] %v733
    %1176 = vst [vmem:[#allocation5 + $0x40] sm:$0xff] %v735
    %1177 = vst [vmem:[#allocation5 + $0x48] sm:$0xff] %v856
    %1178 = vst [vmem:[#allocation5 + $0x50] sm:$0xff] %v858
    %1179 = vst [vmem:[#allocation5 + $0x58] sm:$0xff] %v979
    %1180 = vst [vmem:[#allocation5 + $0x60] sm:$0xff] %v981
    %1181 = vst.msk [vmem:[#allocation5 + $0x68] sm:$0xff] %vm374, %v1101
    %1182 = vst [vmem:[#allocation5 + $0x70] sm:$0xff] %v739
    %1183 = vst [vmem:[#allocation5 + $0x78] sm:$0xff] %v741
    %1184 = vst [vmem:[#allocation5 + $0x80] sm:$0xff] %v862
    %1185 = vst [vmem:[#allocation5 + $0x88] sm:$0xff] %v864
    %1186 = vst [vmem:[#allocation5 + $0x90] sm:$0xff] %v985
    %1187 = vst [vmem:[#allocation5 + $0x98] sm:$0xff] %v987
    %1188 = vst.msk [vmem:[#allocation5 + $0xa0] sm:$0xff] %vm374, %v1106
    %1189 = vst [vmem:[#allocation5 + $0xa8] sm:$0xff] %v743
    %1190 = vst [vmem:[#allocation5 + $0xb0] sm:$0xff] %v745
    %1191 = vst [vmem:[#allocation5 + $0xb8] sm:$0xff] %v866
    %1192 = vst [vmem:[#allocation5 + $0xc0] sm:$0xff] %v868
    %1193 = vst [vmem:[#allocation5 + $0xc8] sm:$0xff] %v989
    %1194 = vst [vmem:[#allocation5 + $0xd0] sm:$0xff] %v991
    %1195 = vst.msk [vmem:[#allocation5 + $0xd8] sm:$0xff] %vm374, %v1109
    %1196 = vst [vmem:[#allocation5 + $0xe0] sm:$0xff] %v749
    %1197 = vst [vmem:[#allocation5 + $0xe8] sm:$0xff] %v751
    %1198 = vst [vmem:[#allocation5 + $0xf0] sm:$0xff] %v872
    %1199 = vst [vmem:[#allocation5 + $0xf8] sm:$0xff] %v874
    %1200 = vst [vmem:[#allocation5 + $0x100] sm:$0xff] %v995
    %1201 = vst [vmem:[#allocation5 + $0x108] sm:$0xff] %v997
    %1202 = vst.msk [vmem:[#allocation5 + $0x110] sm:$0xff] %vm374, %v1114
    %1203 = vst [vmem:[#allocation5 + $0x118] sm:$0xff] %v753
    %1204 = vst [vmem:[#allocation5 + $0x120] sm:$0xff] %v755
    %1205 = vst [vmem:[#allocation5 + $0x128] sm:$0xff] %v876
    %1206 = vst [vmem:[#allocation5 + $0x130] sm:$0xff] %v878
    %1207 = vst [vmem:[#allocation5 + $0x138] sm:$0xff] %v999
    %1208 = vst [vmem:[#allocation5 + $0x140] sm:$0xff] %v1001
    %1209 = vst.msk [vmem:[#allocation5 + $0x148] sm:$0xff] %vm374, %v1117
    %1210 = vst [vmem:[#allocation5 + $0x150] sm:$0xff] %v759
    %1211 = vst [vmem:[#allocation5 + $0x158] sm:$0xff] %v761
    %1212 = vst [vmem:[#allocation5 + $0x160] sm:$0xff] %v882
    %1213 = vst [vmem:[#allocation5 + $0x168] sm:$0xff] %v884
    %1214 = vst [vmem:[#allocation5 + $0x170] sm:$0xff] %v1005
    %1215 = vst [vmem:[#allocation5 + $0x178] sm:$0xff] %v1007
    %1216 = vst.msk [vmem:[#allocation5 + $0x180] sm:$0xff] %vm374, %v1122
    %1217 = vst [vmem:[#allocation5 + $0x188] sm:$0xff] %v763
    %1218 = vst [vmem:[#allocation5 + $0x190] sm:$0xff] %v765
    %1219 = vst [vmem:[#allocation5 + $0x198] sm:$0xff] %v886
    %1220 = vst [vmem:[#allocation5 + $0x1a0] sm:$0xff] %v888
    %1221 = vst [vmem:[#allocation5 + $0x1a8] sm:$0xff] %v1009
    %1222 = vst [vmem:[#allocation5 + $0x1b0] sm:$0xff] %v1011
    %1223 = vst.msk [vmem:[#allocation5 + $0x1b8] sm:$0xff] %vm374, %v1125
    %1224 = vst [vmem:[#allocation5 + $0x1c0] sm:$0xff] %v769
    %1225 = vst [vmem:[#allocation5 + $0x1c8] sm:$0xff] %v771
    %1226 = vst [vmem:[#allocation5 + $0x1d0] sm:$0xff] %v892
    %1227 = vst [vmem:[#allocation5 + $0x1d8] sm:$0xff] %v894
    %1228 = vst [vmem:[#allocation5 + $0x1e0] sm:$0xff] %v1015
    %1229 = vst [vmem:[#allocation5 + $0x1e8] sm:$0xff] %v1017
    %1230 = vst.msk [vmem:[#allocation5 + $0x1f0] sm:$0xff] %vm374, %v1130
    %1231 = vst [vmem:[#allocation5 + $0x1f8] sm:$0xff] %v773
    %1232 = vst [vmem:[#allocation5 + $0x200] sm:$0xff] %v775
    %1233 = vst [vmem:[#allocation5 + $0x208] sm:$0xff] %v896
    %1234 = vst [vmem:[#allocation5 + $0x210] sm:$0xff] %v898
    %1235 = vst [vmem:[#allocation5 + $0x218] sm:$0xff] %v1019
    %1236 = vst [vmem:[#allocation5 + $0x220] sm:$0xff] %v1021
    %1237 = vst.msk [vmem:[#allocation5 + $0x228] sm:$0xff] %vm374, %v1133
    %1238 = vst [vmem:[#allocation5 + $0x230] sm:$0xff] %v779
    %1239 = vst [vmem:[#allocation5 + $0x238] sm:$0xff] %v781
    %1240 = vst [vmem:[#allocation5 + $0x240] sm:$0xff] %v902
    %1241 = vst [vmem:[#allocation5 + $0x248] sm:$0xff] %v904
    %1242 = vst [vmem:[#allocation5 + $0x250] sm:$0xff] %v1025
    %1243 = vst [vmem:[#allocation5 + $0x258] sm:$0xff] %v1027
    %1244 = vst.msk [vmem:[#allocation5 + $0x260] sm:$0xff] %vm374, %v1138
    %1245 = vst [vmem:[#allocation5 + $0x268] sm:$0xff] %v783
    %1246 = vst [vmem:[#allocation5 + $0x270] sm:$0xff] %v785
    %1247 = vst [vmem:[#allocation5 + $0x278] sm:$0xff] %v906
    %1248 = vst [vmem:[#allocation5 + $0x280] sm:$0xff] %v908
    %1249 = vst [vmem:[#allocation5 + $0x288] sm:$0xff] %v1029
    %1250 = vst [vmem:[#allocation5 + $0x290] sm:$0xff] %v1031
    %1251 = vst.msk [vmem:[#allocation5 + $0x298] sm:$0xff] %vm374, %v1141
    %1252 = vst [vmem:[#allocation5 + $0x2a0] sm:$0xff] %v789
    %1253 = vst [vmem:[#allocation5 + $0x2a8] sm:$0xff] %v791
    %1254 = vst [vmem:[#allocation5 + $0x2b0] sm:$0xff] %v912
    %1255 = vst [vmem:[#allocation5 + $0x2b8] sm:$0xff] %v914
    %1256 = vst [vmem:[#allocation5 + $0x2c0] sm:$0xff] %v1035
    %1257 = vst [vmem:[#allocation5 + $0x2c8] sm:$0xff] %v1037
    %1258 = vst.msk [vmem:[#allocation5 + $0x2d0] sm:$0xff] %vm374, %v1146
    %1259 = vst [vmem:[#allocation5 + $0x2d8] sm:$0xff] %v793
    %1260 = vst [vmem:[#allocation5 + $0x2e0] sm:$0xff] %v795
    %1261 = vst [vmem:[#allocation5 + $0x2e8] sm:$0xff] %v916
    %1262 = vst [vmem:[#allocation5 + $0x2f0] sm:$0xff] %v918
    %1263 = vst [vmem:[#allocation5 + $0x2f8] sm:$0xff] %v1039
    %1264 = vst [vmem:[#allocation5 + $0x300] sm:$0xff] %v1041
    %1265 = vst.msk [vmem:[#allocation5 + $0x308] sm:$0xff] %vm374, %v1149
    %1266 = vst [vmem:[#allocation5 + $0x310] sm:$0xff] %v799
    %1267 = vst [vmem:[#allocation5 + $0x318] sm:$0xff] %v801
    %1268 = vst [vmem:[#allocation5 + $0x320] sm:$0xff] %v922
    %1269 = vst [vmem:[#allocation5 + $0x328] sm:$0xff] %v924
    %1270 = vst [vmem:[#allocation5 + $0x330] sm:$0xff] %v1045
    %1271 = vst [vmem:[#allocation5 + $0x338] sm:$0xff] %v1047
    %1272 = vst.msk [vmem:[#allocation5 + $0x340] sm:$0xff] %vm374, %v1154
    %1273 = vst [vmem:[#allocation5 + $0x348] sm:$0xff] %v803
    %1274 = vst [vmem:[#allocation5 + $0x350] sm:$0xff] %v805
    %1275 = vst [vmem:[#allocation5 + $0x358] sm:$0xff] %v926
    %1276 = vst [vmem:[#allocation5 + $0x360] sm:$0xff] %v928
    %1277 = vst [vmem:[#allocation5 + $0x368] sm:$0xff] %v1049
    %1278 = vst [vmem:[#allocation5 + $0x370] sm:$0xff] %v1051
    %1279 = vst.msk [vmem:[#allocation5 + $0x378] sm:$0xff] %vm374, %v1157
    %1280 = vst [vmem:[#allocation5 + $0x380] sm:$0xff] %v809
    %1281 = vst [vmem:[#allocation5 + $0x388] sm:$0xff] %v811
    %1282 = vst [vmem:[#allocation5 + $0x390] sm:$0xff] %v932
    %1283 = vst [vmem:[#allocation5 + $0x398] sm:$0xff] %v934
    %1284 = vst [vmem:[#allocation5 + $0x3a0] sm:$0xff] %v1055
    %1285 = vst [vmem:[#allocation5 + $0x3a8] sm:$0xff] %v1057
    %1286 = vst.msk [vmem:[#allocation5 + $0x3b0] sm:$0xff] %vm374, %v1162
    %1287 = vst [vmem:[#allocation5 + $0x3b8] sm:$0xff] %v813
    %1288 = vst [vmem:[#allocation5 + $0x3c0] sm:$0xff] %v815
    %1289 = vst [vmem:[#allocation5 + $0x3c8] sm:$0xff] %v936
    %1290 = vst [vmem:[#allocation5 + $0x3d0] sm:$0xff] %v938
    %1291 = vst [vmem:[#allocation5 + $0x3d8] sm:$0xff] %v1059
    %1292 = vst [vmem:[#allocation5 + $0x3e0] sm:$0xff] %v1061
    %1293 = vst.msk [vmem:[#allocation5 + $0x3e8] sm:$0xff] %vm374, %v1165
    // Predicated region
    $region26: #{tpu_custom_call.1} parent=1 // pred_check
      _
    $region27: #{tpu_custom_call.1} parent=1 // pred_check_branch
      %1295 = sbr.rel (0) target = $region29
    $region28: #{tpu_custom_call.1} parent=1 // pred_region
      %s1297 = ssub.s32 16128, 16128
      %1298 = vsyncadd [#allocation4], %s1297
      %s1299 = sshll.u32 [#allocation5], 4
      %s1300 = int_to_ptr.vmem [resolvable:$true] %s1299
      %1305 = dma.vmem_to_hbm [thread:$0]  %s1300, 16128, %s5, [#allocation4], 896, 896, 56
    $region29: #{tpu_custom_call.1} parent=1 // pred_fallthru
      _
    // Predicated region
    $region30: #{tpu_custom_call.1} parent=1 // pred_check
      _
    $region31: #{tpu_custom_call.1} parent=1 // pred_check_branch
      %1307 = sbr.rel (0) target = $region33
    $region32: #{tpu_custom_call.1} parent=1 // pred_region
      %1308 = dma.done [#allocation4], 16128
    $region33: #{tpu_custom_call.1} parent=1 // pred_fallthru
      _
    %1309 = vsyncpa [#allocation3], 1
    %1310 = vsyncpa [#allocation4], 1

</llo_original>
